<compile_context>
chip_gen: v5e
topology: v5e:2x2
jax: 0.10.0
libtpu: 0.0.40
codegen_flags: <defaults>
</compile_context>

<pallas_src>
import functools

import jax
import jax.numpy as jnp
from jax.experimental import pallas as pl
from jax.experimental.pallas import tpu as pltpu


def _truncation_kernel(avg_ref, x_ref, o_ref, *, threshold, max_layer):
    # avg_ref: (1, 1, D)   x_ref / o_ref: (bb, lp, D)
    x = x_ref[...]
    xf = x.astype(jnp.float32)
    avgf = avg_ref[...].astype(jnp.float32)          # broadcasts over (bb, lp)

    # Per-layer keep mask computed in-kernel: the layer block always starts at
    # layer 0, so the in-block layer index IS the absolute layer index.
    layer = jax.lax.broadcasted_iota(
        jnp.int32, (x.shape[0], x.shape[1], 1), dimension=1)
    keep = (layer < max_layer).astype(jnp.float32)   # (bb, lp, 1)

    # torch.lerp(avg, x, t) = avg + t*(x - avg); blend instead of where.
    interp = avgf + jnp.float32(threshold) * (xf - avgf)
    o_ref[...] = (xf + keep * (interp - xf)).astype(o_ref.dtype)


def truncation(x, avg_latent, *, max_layer=8, threshold=0.7,
               max_tile_bytes=2 * 1024 * 1024):
    """x: (B, L, D), avg_latent: (D,). Returns same shape/dtype as x."""
    assert x.ndim == 3
    B, L, D = x.shape
    dtype = x.dtype

    if max_layer <= 0:
        return x  # nothing to truncate; pure pass-through

    itemsize = jnp.dtype(dtype).itemsize
    sublane = 8 * max(1, 4 // itemsize)  # 8 for f32, 16 for bf16, 32 for int8

    # Layers actually touched per batch, rounded up so the block's
    # second-to-last dim is sublane-aligned (or equal to the full L).
    lp = min(L, ((min(max_layer, L) + sublane - 1) // sublane) * sublane)

    # Batch-block sizing: tile <= max_tile_bytes, and >= 2 grid steps when
    # B >= 2 (two v7x TensorCores + software pipelining on all generations).
    row_bytes = max(1, lp * D * itemsize)
    bb = max(1, min(B, max_tile_bytes // row_bytes))
    if B >= 2:
        bb = min(bb, (B + 1) // 2)
    grid = (pl.cdiv(B, bb),)

    avg3 = avg_latent.reshape(1, 1, D)

    kernel = functools.partial(
        _truncation_kernel,
        threshold=float(threshold),
        max_layer=int(max_layer),
    )

    out = pl.pallas_call(
        kernel,
        out_shape=jax.ShapeDtypeStruct((B, L, D), dtype),
        grid_spec=pltpu.PrefetchScalarGridSpec(
            num_scalar_prefetch=0,
            grid=grid,
            in_specs=[
                pl.BlockSpec((1, 1, D), lambda i: (0, 0, 0)),    # avg (resident)
                pl.BlockSpec((bb, lp, D), lambda i: (i, 0, 0)),  # truncated layers of x
            ],
            out_specs=pl.BlockSpec((bb, lp, D), lambda i: (i, 0, 0)),
        ),
        # Alias x -> out: layers >= lp are never part of any block and pass
        # through untouched via the shared buffer.
        input_output_aliases={1: 0},
        compiler_params=pltpu.CompilerParams(
            dimension_semantics=("parallel",),
            vmem_limit_bytes=32 * 1024 * 1024,
        ),
    )(avg3, x)

    return out


def _reference(x, avg, max_layer, threshold):
    interp = avg + threshold * (x - avg)
    do_trunc = (jnp.arange(x.shape[1]) < max_layer)[None, :, None]
    return jnp.where(do_trunc, interp, x)


if __name__ == "__main__":
    key = jax.random.PRNGKey(0)
    kx, ka, kx2 = jax.random.split(key, 3)

    # Case 1: in-kernel mask path (max_layer=4 < L=8; padded block covers all layers).
    B, L, D = 2, 8, 128
    max_layer, threshold = 4, 0.7
    x = jax.random.normal(kx, (B, L, D), dtype=jnp.float32)
    avg_latent = jax.random.normal(ka, (D,), dtype=jnp.float32)

    out = truncation(x, avg_latent, max_layer=max_layer, threshold=threshold)
    out = jax.block_until_ready(out)
    ref = _reference(x, avg_latent, max_layer, threshold)
    assert out.shape == (B, L, D)
    assert jnp.allclose(out, ref, atol=1e-5, rtol=1e-5), "case 1 mismatch vs reference"

    # Case 2: alias / pass-through path, StyleGAN-like L=18 with max_layer=8:
    # layers 8..17 are never read or written; also exercises a partial batch block.
    B2, L2, D2 = 3, 18, 128
    x2 = jax.random.normal(kx2, (B2, L2, D2), dtype=jnp.float32)
    out2 = truncation(x2, avg_latent, max_layer=8, threshold=threshold)
    out2 = jax.block_until_ready(out2)
    ref2 = _reference(x2, avg_latent, 8, threshold)
    assert out2.shape == (B2, L2, D2)
    assert jnp.allclose(out2, ref2, atol=1e-5, rtol=1e-5), "case 2 mismatch vs reference"

    print("KERNEL_OK")
</pallas_src>

<mosaic_0001>
module attributes {stable_mosaic.version = 11 : i64} {
  func.func @_truncation_kernel(%arg0: i32, %arg1: memref<1x1x128xf32, #tpu.memory_space<vmem>>, %arg2: memref<1x8x128xf32, #tpu.memory_space<vmem>>, %arg3: memref<1x8x128xf32, #tpu.memory_space<vmem>>) attributes {dimension_semantics = [#tpu.dimension_semantics<parallel>], iteration_bounds = array<i64: 2>, scalar_prefetch = 0 : i64, scratch_operands = 0 : i64, tpu.core_type = #tpu.core_type<tc>, window_params = [{pipeline_mode = #tpu.pipeline_mode<synchronous>, transform_indices = @transform_0, window_bounds = array<i64: 1, 1, 128>}, {transform_indices = @transform_1, window_bounds = array<i64: 1, 8, 128>}, {transform_indices = @transform_2, window_bounds = array<i64: 1, 8, 128>}]} {
    %c0 = arith.constant 0 : index
    %c0_0 = arith.constant 0 : index
    %c0_1 = arith.constant 0 : index
    %0 = vector.load %arg2[%c0, %c0_0, %c0_1] : memref<1x8x128xf32, #tpu.memory_space<vmem>>, vector<1x8x128xf32>
    %c0_2 = arith.constant 0 : index
    %c0_3 = arith.constant 0 : index
    %c0_4 = arith.constant 0 : index
    %1 = vector.load %arg1[%c0_2, %c0_3, %c0_4] : memref<1x1x128xf32, #tpu.memory_space<vmem>>, vector<1x1x128xf32>
    %2 = tpu.iota {dimensions = array<i32: 1>} : vector<1x8x1xi32>
    %c4_i32 = arith.constant 4 : i32
    %3 = vector.broadcast %c4_i32 : i32 to vector<1x8x1xi32>
    %4 = arith.cmpi slt, %2, %3 : vector<1x8x1xi32>
    %5 = arith.extui %4 : vector<1x8x1xi1> to vector<1x8x1xi32>
    %6 = arith.sitofp %5 : vector<1x8x1xi32> to vector<1x8x1xf32>
    %7 = vector.broadcast %1 : vector<1x1x128xf32> to vector<1x8x128xf32>
    %8 = arith.subf %0, %7 : vector<1x8x128xf32>
    %cst = arith.constant 0.699999988 : f32
    %9 = vector.broadcast %cst : f32 to vector<1x8x128xf32>
    %10 = arith.mulf %9, %8 : vector<1x8x128xf32>
    %11 = vector.broadcast %1 : vector<1x1x128xf32> to vector<1x8x128xf32>
    %12 = arith.addf %11, %10 : vector<1x8x128xf32>
    %13 = arith.subf %12, %0 : vector<1x8x128xf32>
    %14 = vector.broadcast %6 : vector<1x8x1xf32> to vector<1x8x128xf32>
    %15 = arith.mulf %14, %13 : vector<1x8x128xf32>
    %16 = arith.addf %0, %15 : vector<1x8x128xf32>
    %c0_5 = arith.constant 0 : index
    %c0_6 = arith.constant 0 : index
    %c0_7 = arith.constant 0 : index
    %17 = vector.load %arg3[%c0_5, %c0_6, %c0_7] : memref<1x8x128xf32, #tpu.memory_space<vmem>>, vector<1x8x128xf32>
    tpu.vector_store %arg3[%c0_5, %c0_6, %c0_7], %16 {strides = array<i32>} : memref<1x8x128xf32, #tpu.memory_space<vmem>>, vector<1x8x128xf32>,
    return
  }
  func.func @transform_0(%arg0: i32) -> (i32, i32, i32) {
    %c0_i32 = arith.constant 0 : i32
    %c0_i32_0 = arith.constant 0 : i32
    %c0_i32_1 = arith.constant 0 : i32
    %c0_i32_2 = arith.constant 0 : i32
    return %c0_i32, %c0_i32_0, %c0_i32_1 : i32, i32, i32
  }
  func.func @transform_1(%arg0: i32) -> (i32, i32, i32) {
    %c0_i32 = arith.constant 0 : i32
    %c0_i32_0 = arith.constant 0 : i32
    %c0_i32_1 = arith.constant 0 : i32
    return %arg0, %c0_i32, %c0_i32_0 : i32, i32, i32
  }
  func.func @transform_2(%arg0: i32) -> (i32, i32, i32) {
    %c0_i32 = arith.constant 0 : i32
    %c0_i32_0 = arith.constant 0 : i32
    %c0_i32_1 = arith.constant 0 : i32
    return %arg0, %c0_i32, %c0_i32_0 : i32, i32, i32
  }
}

</mosaic_0001>

<llo_original>
// kernel: tpu_custom_call.1
$region0: #{tpu_custom_call.1}
  #allocation0 [shape = 'u32[]', space=smem, size = 0x4, offset = 0x4, fixed_abs, tag = 'smem constant byte address 0x4 - core index']
  #allocation1 [shape = 'u32[72,128]{1,0:T(1,128)}', space=vmem, size = 0x9000, scoped, tag = 'internal scratch']
  %s0 = inlined_call_operand.vmem [shape: f32[1,1,128], index: 0, kind: input, shape index: {}]
  %s1 = inlined_call_operand.hbm [shape: f32[2,8,128], index: 1, kind: input, shape index: {}, may-alias: {1,2}]
  %s2 = inlined_call_operand.hbm [shape: f32[2,8,128], index: 2, kind: output, shape index: {}, may-alias: {1,2}]
  %s3 = sld [smem:[#allocation0]]
  $region45: #{tpu_custom_call.1} parent=0
    _
  %s5 = ssub.s32 1, %s3
  %s6 = scalar_select 0, %s5, %s3
  $region1: #{tpu_custom_call.1} parent=0
    #allocation2 [shape = 'u8[8192]{0}', space=vmem, size = 0x2000, scoped, tag = 'input window, operand 1']
    #allocation3 [shape = 's32[2]{0}', space=sflag, size = 0x8, scoped, tag = 'scoped memory for tpu_custom_call.1']
    #allocation4 [shape = 's32[2]{0}', space=sflag, size = 0x8, scoped, tag = 'scoped memory for tpu_custom_call.1']
    #allocation5 [shape = 'u8[8192]{0}', space=vmem, size = 0x2000, scoped, tag = 'output window, operand 0']
    %7 = vsyncpa [#allocation3], 0
    %s8 = scalar_lea.sflag [#allocation3], 1
    %9 = vsyncpa %s8, 0
    %10 = vsyncpa [#allocation4], 0
    %s11 = scalar_lea.sflag [#allocation4], 1
    %12 = vsyncpa %s11, 0
    loop: start=0, step=1, limit=4
    $region2: #{tpu_custom_call.1} parent=1 // loop_pre_header
      _
    $region3: #{tpu_custom_call.1} parent=1 // loop_header
      %s14 = sphi 0, %s18
      %p15 = scmp.ge.s32.totalorder %s14, 4
      %s22 = sphi 0, %s22
      %s24 = sphi 0, %s22
      %s25 = sphi 0, %s24
      %s39 = sphi 0, %s25
      %s45 = sphi 0, %s47
      %s48 = sphi 0, %s45
      %s49 = sphi 0, %s48
      %s65 = sphi 0, %s49
      %s71 = sphi 0, %s73
      %s74 = sphi 0, %s71
      %s75 = sphi 0, %s74
      %s91 = sphi 0, %s75
    $region4: #{tpu_custom_call.1} parent=1 // loop_header_branch
      %17 = sbr.rel (%p15) target = $region8
    $region5: #{tpu_custom_call.1} parent=1 // loop_body
      %s19 = ssub.s32 %s14, 1
      %s20 = ssub.s32 %s14, 2
      %s21 = sadd.s32 %s14, 1
      %s23 = sadd.s32 %s22, 1
      %p26 = scmp.eq.s32.totalorder %s14, 1
      %p27 = scmp.ne.s32.totalorder %s22, %s24
      %p28 = scmp.eq.s32.totalorder %s14, 0
      %p29 = por %p27, %p28
      %p30 = scmp.ne.s32.totalorder %s22, %s24
      %p31 = scmp.eq.s32.totalorder %s19, 1
      %p32 = por %p30, %p31
      %p33 = scmp.ne.s32.totalorder %s24, %s25
      %p34 = scmp.eq.s32.totalorder %s19, 0
      %p35 = por %p33, %p34
      %p36 = scmp.ne.s32.totalorder %s24, %s25
      %p37 = scmp.eq.s32.totalorder %s20, 1
      %p38 = por %p36, %p37
      %p40 = scmp.ne.s32.totalorder %s25, %s39
      %p41 = scmp.eq.s32.totalorder %s20, 0
      %p42 = por %p40, %p41
      %s43 = ssub.s32 %s14, %s21
      %p44 = scmp.eq.s32.totalorder %s43, 0
      %s46 = sadd.s32 %s45, 1
      %s47 = scalar_select %p44, %s45, %s46
      %p50 = pneg %p44
      %p51 = scmp.eq.s32.totalorder %s14, 1
      %p52 = por %p50, %p51
      %p53 = scmp.ne.s32.totalorder %s45, %s48
      %p54 = scmp.eq.s32.totalorder %s14, 0
      %p55 = por %p53, %p54
      %p56 = scmp.ne.s32.totalorder %s45, %s48
      %p57 = scmp.eq.s32.totalorder %s19, 1
      %p58 = por %p56, %p57
      %p59 = scmp.ne.s32.totalorder %s48, %s49
      %p60 = scmp.eq.s32.totalorder %s19, 0
      %p61 = por %p59, %p60
      %p62 = scmp.ne.s32.totalorder %s48, %s49
      %p63 = scmp.eq.s32.totalorder %s20, 1
      %p64 = por %p62, %p63
      %p66 = scmp.ne.s32.totalorder %s49, %s65
      %p67 = scmp.eq.s32.totalorder %s20, 0
      %p68 = por %p66, %p67
      %s69 = ssub.s32 %s14, %s21
      %p70 = scmp.eq.s32.totalorder %s69, 0
      %s72 = sadd.s32 %s71, 1
      %s73 = scalar_select %p70, %s71, %s72
      %p76 = pneg %p70
      %p77 = scmp.eq.s32.totalorder %s14, 1
      %p78 = por %p76, %p77
      %p79 = scmp.ne.s32.totalorder %s71, %s74
      %p80 = scmp.eq.s32.totalorder %s14, 0
      %p81 = por %p79, %p80
      %p82 = scmp.ne.s32.totalorder %s71, %s74
      %p83 = scmp.eq.s32.totalorder %s19, 1
      %p84 = por %p82, %p83
      %p85 = scmp.ne.s32.totalorder %s74, %s75
      %p86 = scmp.eq.s32.totalorder %s19, 0
      %p87 = por %p85, %p86
      %p88 = scmp.ne.s32.totalorder %s74, %s75
      %p89 = scmp.eq.s32.totalorder %s20, 1
      %p90 = por %p88, %p89
      %p92 = scmp.ne.s32.totalorder %s75, %s91
      %p93 = scmp.eq.s32.totalorder %s20, 0
      %p94 = por %p92, %p93
      %p95 = scmp.le.s32.totalorder 1, %s14
      %p96 = scmp.lt.s32.totalorder %s14, 3
      %p97 = pnand %p95, %p96
      %p98 = pneg %p97
      // Predicated region
      $region9: #{tpu_custom_call.1} parent=5 // pred_check
        _
      $region10: #{tpu_custom_call.1} parent=5 // pred_check_branch
        %100 = sbr.rel (%p97) target = $region12
      $region11: #{tpu_custom_call.1} parent=5 // pred_region
        %s101 = ssub.s32 %s14, 1
        // Predicated region
        $region13: #{tpu_custom_call.1} parent=11 // pred_check
          %p102 = pneg %p35
        $region14: #{tpu_custom_call.1} parent=11 // pred_check_branch
          %104 = sbr.rel (%p102) target = $region16
        $region15: #{tpu_custom_call.1} parent=11 // pred_region
          _
        $region16: #{tpu_custom_call.1} parent=11 // pred_fallthru
          _
      $region12: #{tpu_custom_call.1} parent=5 // pred_fallthru
        _
      %p105 = scmp.lt.s32.totalorder %s14, 2
      // Predicated region
      $region17: #{tpu_custom_call.1} parent=5 // pred_check
        %p106 = pneg %p105
      $region18: #{tpu_custom_call.1} parent=5 // pred_check_branch
        %108 = sbr.rel (%p106) target = $region20
      $region19: #{tpu_custom_call.1} parent=5 // pred_region
        // Predicated region
        $region21: #{tpu_custom_call.1} parent=19 // pred_check
          %p109 = pneg %p55
        $region22: #{tpu_custom_call.1} parent=19 // pred_check_branch
          %111 = sbr.rel (%p109) target = $region24
        $region23: #{tpu_custom_call.1} parent=19 // pred_region
          %s112 = sand.u32 %s45, 1
          %s113 = scalar_lea.sflag [#allocation3], %s112
          %s114 = sand.u32 %s45, 1
          %s115 = smul.addr %s114, 8
          %s116 = scalar_lea.vmem [#allocation2], %s115
          %118 = vsyncadd %s113, 0
          %s119 = smul.addr %s14, 8
          %s120 = scalar_lea.hbm %s1, %s119
          %s122 = sshll.u32 %s120, 4
          %s123 = int_to_ptr.hbm [resolvable:$true] %s122
          %s124 = sshll.u32 %s116, 4
          %s125 = int_to_ptr.vmem [resolvable:$true] %s124
          %127 = dma.hbm_to_vmem [thread:$0]  %s123, 128, %s125, %s113
        $region24: #{tpu_custom_call.1} parent=19 // pred_fallthru
          _
      $region20: #{tpu_custom_call.1} parent=5 // pred_fallthru
        _
      %p128 = scmp.le.s32.totalorder 1, %s14
      %p129 = scmp.lt.s32.totalorder %s14, 3
      %p130 = pnand %p128, %p129
      %p131 = pneg %p130
      // Predicated region
      $region25: #{tpu_custom_call.1} parent=5 // pred_check
        _
      $region26: #{tpu_custom_call.1} parent=5 // pred_check_branch
        %133 = sbr.rel (%p130) target = $region28
      $region27: #{tpu_custom_call.1} parent=5 // pred_region
        %s134 = ssub.s32 %s14, 1
        %s135 = sand.u32 %s48, 1
        %s136 = scalar_lea.sflag [#allocation3], %s135
        %s137 = sand.u32 %s48, 1
        %s138 = smul.addr %s137, 8
        %s139 = scalar_lea.vmem [#allocation2], %s138
        // Predicated region
        $region29: #{tpu_custom_call.1} parent=27 // pred_check
          %p140 = pneg %p61
        $region30: #{tpu_custom_call.1} parent=27 // pred_check_branch
          %142 = sbr.rel (%p140) target = $region32
        $region31: #{tpu_custom_call.1} parent=27 // pred_region
          %144 = dma.done %s136, 128
        $region32: #{tpu_custom_call.1} parent=27 // pred_fallthru
          _
        %p145 = pneg %p35
        %p146 = pneg %p32
        %s147 = sand.u32 %s48, 1
        %s148 = scalar_lea.sflag [#allocation3], %s147
        %s149 = sand.u32 %s48, 1
        %s150 = smul.addr %s149, 8
        %s151 = scalar_lea.vmem [#allocation2], %s150
        %p152 = pneg %p61
        %p153 = pneg %p58
        %p154 = pneg %p87
        %p155 = pneg %p84
        %s156 = sand.u32 %s74, 1
        %s157 = scalar_lea.sflag [#allocation4], %s156
        %s158 = sand.u32 %s74, 1
        %s159 = smul.addr %s158, 8
        %s160 = scalar_lea.vmem [#allocation5], %s159
        %v161 = vld [vmem:[%s139] sm:$0xff]
        %v162 = vld [vmem:[%s0] sm:$0x1]
        %v163 = vlaneseq
        %v164 = vshrl.u32 %v163, 7
        %vm165 = vcmp.lt.s32.totalorder %v164, 4
        %v166 = vsel %vm165, 1, 0
        %v167 = vcvt.s32.f32 %v166
        %v169 = vperm.slane %v162, 0
        %v171 = vsub.f32 %v161, %v169
        %v172 = vmul.f32 %v171, 0.7
        %v173 = vadd.f32 %v169, %v172
        %v174 = vsub.f32 %v173, %v161
        %v175 = vmul.f32 %v167, %v174
        %v176 = vadd.f32 %v161, %v175
        %177 = vst [vmem:[%s160] sm:$0xff] %v176
        %s178 = sand.u32 %s74, 1
        %s179 = scalar_lea.sflag [#allocation4], %s178
        %s180 = sand.u32 %s74, 1
        %s181 = smul.addr %s180, 8
        %s182 = scalar_lea.vmem [#allocation5], %s181
        // Predicated region
        $region33: #{tpu_custom_call.1} parent=27 // pred_check
          %p183 = pneg %p84
        $region34: #{tpu_custom_call.1} parent=27 // pred_check_branch
          %185 = sbr.rel (%p183) target = $region36
        $region35: #{tpu_custom_call.1} parent=27 // pred_region
          %187 = vsyncadd %s179, 0
          %s188 = smul.addr %s19, 8
          %s189 = scalar_lea.hbm %s2, %s188
          %s191 = sshll.u32 %s182, 4
          %s192 = int_to_ptr.vmem [resolvable:$true] %s191
          %s193 = sshll.u32 %s189, 4
          %s194 = int_to_ptr.hbm [resolvable:$true] %s193
          %196 = dma.vmem_to_hbm [thread:$0]  %s192, 128, %s194, %s179
        $region36: #{tpu_custom_call.1} parent=27 // pred_fallthru
          _
      $region28: #{tpu_custom_call.1} parent=5 // pred_fallthru
        _
      %p197 = scmp.le.s32.totalorder 2, %s14
      // Predicated region
      $region37: #{tpu_custom_call.1} parent=5 // pred_check
        %p198 = pneg %p197
      $region38: #{tpu_custom_call.1} parent=5 // pred_check_branch
        %200 = sbr.rel (%p198) target = $region40
      $region39: #{tpu_custom_call.1} parent=5 // pred_region
        %s201 = ssub.s32 %s14, 2
        // Predicated region
        $region41: #{tpu_custom_call.1} parent=39 // pred_check
          %p202 = pneg %p90
        $region42: #{tpu_custom_call.1} parent=39 // pred_check_branch
          %204 = sbr.rel (%p202) target = $region44
        $region43: #{tpu_custom_call.1} parent=39 // pred_region
          %s205 = sand.u32 %s75, 1
          %s206 = scalar_lea.sflag [#allocation4], %s205
          %s207 = sand.u32 %s75, 1
          %s208 = smul.addr %s207, 8
          %s209 = scalar_lea.vmem [#allocation5], %s208
          %211 = dma.done %s206, 128
        $region44: #{tpu_custom_call.1} parent=39 // pred_fallthru
          _
      $region40: #{tpu_custom_call.1} parent=5 // pred_fallthru
        _
    $region6: #{tpu_custom_call.1} parent=1 // loop_footer
      %s18 = sadd.s32 1, %s14
    $region7: #{tpu_custom_call.1} parent=1 // loop_footer_branch
      %13 = sbr.rel target = $region3
    $region8: #{tpu_custom_call.1} parent=1 // loop_exit
      _
    %212 = vsyncpa [#allocation3], 1
    %s213 = scalar_lea.sflag [#allocation3], 1
    %214 = vsyncpa %s213, 1
    %215 = vsyncpa [#allocation4], 1
    %s216 = scalar_lea.sflag [#allocation4], 1
    %217 = vsyncpa %s216, 1

</llo_original>
